<compile_context>
chip_gen: v5e
topology: v5e:2x2
jax: 0.10.0
libtpu: 0.0.40
codegen_flags: <defaults>
</compile_context>

<pallas_src>
import functools
import math

import numpy as np
import jax
import jax.numpy as jnp
from jax.experimental import pallas as pl
from jax.experimental.pallas import tpu as pltpu


# dense conv matrix allowed while <= (2048)^2 * 2 B = 8 MiB bf16 and its FLOPs stay
# hidden under the HBM-bound floor; beyond that use the O(L2) stencil epilogue.
_DENSE_CONV_MAX_L2 = 2048


def _round_up(x, m):
    return (x + m - 1) // m * m


# ------------------------------- kernels -------------------------------

def _mlp(x_ref, w1_ref, b1_ref, w2_ref, b2_ref):
    """tanh(x @ W1 + b1) @ W2 + b2 : bf16 MXU inputs, f32 accumulation, f32 bias adds."""
    x = x_ref[...].astype(jnp.bfloat16)
    h = jnp.tanh(
        jnp.dot(x, w1_ref[...], preferred_element_type=jnp.float32) + b1_ref[...])
    return (jnp.dot(h.astype(jnp.bfloat16), w2_ref[...],
                    preferred_element_type=jnp.float32) + b2_ref[...])


def _softplus(z):
    # Stable softplus; equals log1p(exp(-|z|)) + max(z,0) to ~1e-7 abs in this range.
    return jnp.maximum(z, 0.0) + jnp.log(1.0 + jnp.exp(-jnp.abs(z)))


def _kernel_plain(x_ref, w1_ref, b1_ref, w2_ref, b2_ref, out_ref):
    out_ref[...] = _mlp(x_ref, w1_ref, b1_ref, w2_ref, b2_ref).astype(out_ref.dtype)


def _kernel_conv_dense(x_ref, w1_ref, b1_ref, w2_ref, b2_ref, cm_ref, cb_ref, out_ref):
    o = _mlp(x_ref, w1_ref, b1_ref, w2_ref, b2_ref)
    z = jnp.dot(o.astype(jnp.bfloat16), cm_ref[...],
                preferred_element_type=jnp.float32) + cb_ref[...]
    out_ref[...] = _softplus(z).astype(out_ref.dtype)


def _kernel_conv_stencil(x_ref, w1_ref, b1_ref, w2_ref, b2_ref, taps_ref,
                         out_ref, buf_ref, *, S, L2, G):
    """5x5 conv as a zero-halo stencil on the flattened image.

    taps_ref rows 0..24 hold conv_w[tap] pre-masked by column validity; row 25 is the
    conv bias.  The halo (width G >= 2*S+2, lane-aligned) supplies zeros for row
    over/under-flow, so only static shifted window loads + VPU mul/add are needed.
    """
    o = _mlp(x_ref, w1_ref, b1_ref, w2_ref, b2_ref)
    # Re-zero every step: under dimension_semantics=("parallel",) a core may never run
    # grid step 0, so a one-time init would be unsafe.
    buf_ref[...] = jnp.zeros_like(buf_ref)
    buf_ref[:, G:G + L2] = o                       # lane-aligned interior store
    acc = None
    t = 0
    for di in range(-2, 3):
        for dj in range(-2, 3):
            off = di * S + dj
            term = buf_ref[:, G + off:G + off + L2] * taps_ref[t:t + 1, :]
            acc = term if acc is None else acc + term
            t += 1
    z = acc + taps_ref[25:26, :]                   # conv bias row
    out_ref[...] = _softplus(z).astype(out_ref.dtype)


# ----------------------------- param packing -----------------------------

def _conv_to_matrix(conv_w, L2):
    """5x5 / padding=2 / single-channel conv as (L2, L2) M with
    conv(img).flatten() == img.flatten() @ M  (row-major flatten)."""
    S = int(math.isqrt(L2))
    rows, cols, taps = [], [], []
    for i in range(S):
        for j in range(S):
            for ki in range(5):
                for kj in range(5):
                    ii, jj = i + ki - 2, j + kj - 2
                    if 0 <= ii < S and 0 <= jj < S:
                        rows.append(ii * S + jj)
                        cols.append(i * S + j)
                        taps.append(ki * 5 + kj)
    rows = np.asarray(rows, np.int32)
    cols = np.asarray(cols, np.int32)
    taps = np.asarray(taps, np.int32)
    vals = jnp.asarray(conv_w, jnp.float32).reshape(-1)[taps]
    return jnp.zeros((L2, L2), jnp.float32).at[rows, cols].add(vals)


def _conv_taps(conv_w, conv_b, L2):
    """(32, L2) f32: row t (= 5*(di+2)+(dj+2)) holds conv_w[di+2, dj+2] masked by the
    column validity of horizontal offset dj; row 25 is the conv bias."""
    S = int(math.isqrt(L2))
    w_flat = jnp.asarray(conv_w, jnp.float32).reshape(25)
    col = jnp.arange(L2) % S
    dj = jnp.arange(-2, 3)
    shifted = col[None, :] + dj[:, None]
    valid = ((shifted >= 0) & (shifted < S)).astype(jnp.float32)       # (5, L2)
    rows = w_flat[:, None] * jnp.tile(valid, (5, 1))                   # (25, L2)
    return (jnp.zeros((32, L2), jnp.float32)
            .at[:25].set(rows)
            .at[25].set(jnp.asarray(conv_b, jnp.float32)))


def pack_params(w1, b1, w2, b2, conv_w=None, conv_b=None, conv_mode="auto"):
    """Weights stored (in_features, out_features); matmul weights in bf16 (MXU native),
    biases kept f32 (added on the VPU after f32 accumulation)."""
    w1 = jnp.asarray(w1, jnp.float32)
    w2 = jnp.asarray(w2, jnp.float32)
    L1, K = w1.shape
    L2 = w2.shape[1]
    packed = {
        "w1": w1.astype(jnp.bfloat16),
        "b1": jnp.asarray(b1, jnp.float32).reshape(1, K),
        "w2": w2.astype(jnp.bfloat16),
        "b2": jnp.asarray(b2, jnp.float32).reshape(1, L2),
    }
    if conv_w is not None:
        S = int(math.isqrt(L2))
        assert S * S == L2, "smooth_output requires L2 to be a perfect square"
        mode = conv_mode
        if mode == "auto":
            mode = "dense" if L2 <= _DENSE_CONV_MAX_L2 else "stencil"
        if mode == "dense":
            packed["conv_mat"] = _conv_to_matrix(conv_w, L2).astype(jnp.bfloat16)
            packed["conv_bias_row"] = jnp.full((1, L2), jnp.asarray(conv_b, jnp.float32))
        else:
            packed["conv_taps"] = _conv_taps(conv_w, conv_b, L2)
    return packed


# ------------------------------- wrapper -------------------------------

def _pick_tb(B, L1, L2, tb):
    TB = max(8, min(tb, _round_up(B, 8)))
    # Cap the per-step working set (x block + a few f32 temps of width L2) so the conv
    # epilogue never threatens v7x's 64 MiB VMEM, but keep >= 256 rows to fill the
    # 256-row MXU M dim on v6e/v7x (>= 128 on v5e).
    row_bytes = 4 * (L1 + 4 * L2)
    TB = min(TB, max(256, (6 * 2 ** 20 // row_bytes) // 8 * 8))
    # v7x megacore: make a big batch yield >= 2 grid steps so the "parallel" axis
    # actually spans both TensorCores.
    if _round_up(B, TB) // TB < 2 and B >= 16:
        TB = min(TB, _round_up((B + 1) // 2, 8))
    return TB


@functools.partial(jax.jit, static_argnames=("tb",))
def _netg_forward(x, w1, b1, w2, b2, conv_mat, conv_bias_row, conv_taps, *, tb):
    B, L1 = x.shape
    K = w1.shape[1]
    L2 = w2.shape[1]
    dense_conv = conv_mat is not None
    stencil_conv = conv_taps is not None

    TB = _pick_tb(B, L1, L2, tb)
    Bp = _round_up(B, TB)
    if Bp == B:
        xk = x     # no wrapper HBM pass over x: cast to bf16 inside the kernel
    else:
        # batch padding required: fuse the bf16 cast into the same materialisation
        xk = jnp.zeros((Bp, L1), jnp.bfloat16).at[:B, :].set(x.astype(jnp.bfloat16))

    in_specs = [
        pl.BlockSpec((TB, L1), lambda i: (i, 0)),     # x: batch-tiled
        pl.BlockSpec((L1, K), lambda i: (0, 0)),      # weights/biases: VMEM-resident
        pl.BlockSpec((1, K), lambda i: (0, 0)),
        pl.BlockSpec((K, L2), lambda i: (0, 0)),
        pl.BlockSpec((1, L2), lambda i: (0, 0)),
    ]
    inputs = [xk, w1, b1, w2, b2]
    scratch_shapes = []
    scratch_bytes = 0

    if dense_conv:
        kernel = _kernel_conv_dense
        in_specs += [pl.BlockSpec((L2, L2), lambda i: (0, 0)),
                     pl.BlockSpec((1, L2), lambda i: (0, 0))]
        inputs += [conv_mat, conv_bias_row]
    elif stencil_conv:
        S = int(math.isqrt(L2))
        G = _round_up(2 * S + 2, 128)   # lane-aligned halo => aligned interior store
        kernel = functools.partial(_kernel_conv_stencil, S=S, L2=L2, G=G)
        in_specs += [pl.BlockSpec((32, L2), lambda i: (0, 0))]
        inputs += [conv_taps]
        scratch_shapes = [pltpu.VMEM((TB, L2 + 2 * G), jnp.float32)]
        scratch_bytes = TB * (L2 + 2 * G) * 4
    else:
        kernel = _kernel_plain

    # Rough VMEM residency (blocks are double-buffered by default); only raise the
    # scoped limit when it would exceed the ~32 MiB default, capped to v7x-safe 64 MiB.
    est = 2 * TB * L1 * xk.dtype.itemsize + 2 * TB * L2 * 4
    est += 2 * sum(int(a.size) * a.dtype.itemsize for a in inputs[1:])
    est += scratch_bytes + 6 * TB * L2 * 4
    vmem_limit = None if est <= 24 * 2 ** 20 else min(2 * est, 64 * 2 ** 20)

    out = pl.pallas_call(
        kernel,
        out_shape=jax.ShapeDtypeStruct((Bp, L2), jnp.float32),
        grid=(Bp // TB,),
        in_specs=in_specs,
        out_specs=pl.BlockSpec((TB, L2), lambda i: (i, 0)),
        scratch_shapes=scratch_shapes,
        compiler_params=pltpu.CompilerParams(
            dimension_semantics=("parallel",),   # megacore / v7x: shard batch tiles
            vmem_limit_bytes=vmem_limit,
        ),
    )(*inputs)
    return out if Bp == B else out[:B]


def netg_images_forward(x, packed, *, tb=512):
    return _netg_forward(
        x, packed["w1"], packed["b1"], packed["w2"], packed["b2"],
        packed.get("conv_mat"), packed.get("conv_bias_row"), packed.get("conv_taps"),
        tb=tb)


# --------------------------- reference / init ---------------------------

def netg_reference(x, w1, b1, w2, b2, conv_w=None, conv_b=None, quantized=False):
    """Pure-JAX reference.  quantized=True mirrors the kernel's bf16 MXU inputs."""
    if quantized:
        q = lambda a: a.astype(jnp.bfloat16).astype(jnp.float32)
        x, w1, w2 = q(x), q(w1), q(w2)
    h = jnp.tanh(x @ w1 + b1)
    out = h @ w2 + b2
    if conv_w is not None:
        B, L2 = out.shape
        S = int(math.isqrt(L2))
        img = out.reshape(B, S, S)
        imgp = jnp.pad(img, ((0, 0), (2, 2), (2, 2)))
        acc = jnp.zeros_like(img)
        for ki in range(5):
            for kj in range(5):
                acc = acc + conv_w[ki, kj] * imgp[:, ki:ki + S, kj:kj + S]
        acc = acc + conv_b
        out = (jnp.maximum(acc, 0.0) + jnp.log1p(jnp.exp(-jnp.abs(acc)))).reshape(B, L2)
    return out


def init_params(key, L1, K, L2):
    """PyTorch-default uniform(+/-1/sqrt(fan_in)) init; weights stored (in, out)."""
    def linear(k, fan_in, fan_out):
        kw, kb = jax.random.split(k)
        bound = 1.0 / math.sqrt(fan_in)
        w = jax.random.uniform(kw, (fan_in, fan_out), jnp.float32, -bound, bound)
        b = jax.random.uniform(kb, (fan_out,), jnp.float32, -bound, bound)
        return w, b

    k1, k2, k3 = jax.random.split(key, 3)
    w1, b1 = linear(k1, L1, K)          # l1
    w2, b2 = linear(k2, K, L2)          # l2
    bound = 1.0 / math.sqrt(25.0)       # Conv2d(1,1,5): fan_in = 25
    kcw, kcb = jax.random.split(k3)
    conv_w = jax.random.uniform(kcw, (5, 5), jnp.float32, -bound, bound)
    conv_b = jax.random.uniform(kcb, (), jnp.float32, -bound, bound)
    return w1, b1, w2, b2, conv_w, conv_b


if __name__ == "__main__":
    # Small shapes consistent with the module; L2 a perfect square (8x8 image).
    L1, K, L2 = 64, 32, 64

    key = jax.random.PRNGKey(0)
    kx1, kx2, kp = jax.random.split(key, 3)
    w1, b1, w2, b2, conv_w, conv_b = init_params(kp, L1, K, L2)

    def check(out, x, conv, tol_q):
        cw = conv_w if conv else None
        cb = conv_b if conv else None
        ref = netg_reference(x, w1, b1, w2, b2, cw, cb)
        ref_q = netg_reference(x, w1, b1, w2, b2, cw, cb, quantized=True)
        assert out.shape == ref.shape, (out.shape, ref.shape)
        # tight: reference using the same bf16-rounded MXU operands as the kernel
        assert bool(jnp.allclose(out, ref_q, rtol=tol_q, atol=tol_q)), \
            float(jnp.max(jnp.abs(out - ref_q)))
        # loose: full-f32 module semantics (bf16 MXU-input tolerance)
        assert bool(jnp.allclose(out, ref, rtol=5e-2, atol=5e-2)), \
            float(jnp.max(jnp.abs(out - ref)))

    # 1) smooth_output=False; batch not a multiple of the tile -> exercises pad/cast path
    xa = jax.random.normal(kx1, (13, L1), jnp.float32)
    out = netg_images_forward(xa, pack_params(w1, b1, w2, b2))
    jax.block_until_ready(out)
    check(out, xa, conv=False, tol_q=2e-3)

    # 2) smooth_output=True, dense conv-as-matmul epilogue (what 'auto' picks at small L2)
    xb = jax.random.normal(kx2, (16, L1), jnp.float32)   # 2 grid steps -> both TCs on v7x
    out = netg_images_forward(
        xb, pack_params(w1, b1, w2, b2, conv_w, conv_b, conv_mode="dense"))
    jax.block_until_ready(out)
    check(out, xb, conv=True, tol_q=2e-2)

    # 3) smooth_output=True, O(L2) halo-stencil conv (what 'auto' picks at large L2,
    #    where the dense matrix would blow v7x VMEM / dominate MXU time)
    out = netg_images_forward(
        xb, pack_params(w1, b1, w2, b2, conv_w, conv_b, conv_mode="stencil"))
    jax.block_until_ready(out)
    check(out, xb, conv=True, tol_q=2e-3)

    print("KERNEL_OK")
</pallas_src>

<mosaic_0001>
module attributes {stable_mosaic.version = 11 : i64} {
  func.func @_kernel_plain(%arg0: i32, %arg1: memref<16x64xbf16, #tpu.memory_space<vmem>>, %arg2: memref<64x32xbf16, #tpu.memory_space<vmem>>, %arg3: memref<1x32xf32, #tpu.memory_space<vmem>>, %arg4: memref<32x64xbf16, #tpu.memory_space<vmem>>, %arg5: memref<1x64xf32, #tpu.memory_space<vmem>>, %arg6: memref<16x64xf32, #tpu.memory_space<vmem>>) attributes {dimension_semantics = [#tpu.dimension_semantics<parallel>], iteration_bounds = array<i64: 1>, scalar_prefetch = 0 : i64, scratch_operands = 0 : i64, tpu.core_type = #tpu.core_type<tc>, window_params = [{transform_indices = @transform_0, window_bounds = array<i64: 16, 64>}, {pipeline_mode = #tpu.pipeline_mode<synchronous>, transform_indices = @transform_1, window_bounds = array<i64: 64, 32>}, {pipeline_mode = #tpu.pipeline_mode<synchronous>, transform_indices = @transform_2, window_bounds = array<i64: 1, 32>}, {pipeline_mode = #tpu.pipeline_mode<synchronous>, transform_indices = @transform_3, window_bounds = array<i64: 32, 64>}, {pipeline_mode = #tpu.pipeline_mode<synchronous>, transform_indices = @transform_4, window_bounds = array<i64: 1, 64>}, {transform_indices = @transform_5, window_bounds = array<i64: 16, 64>}]} {
    %c0 = arith.constant 0 : index
    %c0_0 = arith.constant 0 : index
    %0 = vector.load %arg1[%c0, %c0_0] : memref<16x64xbf16, #tpu.memory_space<vmem>>, vector<16x64xbf16>
    %c0_1 = arith.constant 0 : index
    %c0_2 = arith.constant 0 : index
    %1 = vector.load %arg2[%c0_1, %c0_2] : memref<64x32xbf16, #tpu.memory_space<vmem>>, vector<64x32xbf16>
    %cst = arith.constant dense<0.000000e+00> : vector<16x32xf32>
    %2 = tpu.matmul %0, %1, %cst {dimension_numbers = #tpu.dot_dimension_numbers<[1], [0], [0], [1], [0, 0, 1, 1], [], []>} : vector<16x64xbf16>, vector<64x32xbf16>, vector<16x32xf32> -> vector<16x32xf32>
    %c0_3 = arith.constant 0 : index
    %c0_4 = arith.constant 0 : index
    %3 = vector.load %arg3[%c0_3, %c0_4] : memref<1x32xf32, #tpu.memory_space<vmem>>, vector<1x32xf32>
    %4 = vector.broadcast %3 : vector<1x32xf32> to vector<16x32xf32>
    %5 = arith.addf %2, %4 : vector<16x32xf32>
    %6 = math.tanh %5 : vector<16x32xf32>
    %7 = arith.truncf %6 : vector<16x32xf32> to vector<16x32xbf16>
    %c0_5 = arith.constant 0 : index
    %c0_6 = arith.constant 0 : index
    %8 = vector.load %arg4[%c0_5, %c0_6] : memref<32x64xbf16, #tpu.memory_space<vmem>>, vector<32x64xbf16>
    %cst_7 = arith.constant dense<0.000000e+00> : vector<16x64xf32>
    %9 = tpu.matmul %7, %8, %cst_7 {dimension_numbers = #tpu.dot_dimension_numbers<[1], [0], [0], [1], [0, 0, 1, 1], [], []>} : vector<16x32xbf16>, vector<32x64xbf16>, vector<16x64xf32> -> vector<16x64xf32>
    %c0_8 = arith.constant 0 : index
    %c0_9 = arith.constant 0 : index
    %10 = vector.load %arg5[%c0_8, %c0_9] : memref<1x64xf32, #tpu.memory_space<vmem>>, vector<1x64xf32>
    %11 = vector.broadcast %10 : vector<1x64xf32> to vector<16x64xf32>
    %12 = arith.addf %9, %11 : vector<16x64xf32>
    %c0_10 = arith.constant 0 : index
    %c0_11 = arith.constant 0 : index
    %13 = vector.load %arg6[%c0_10, %c0_11] : memref<16x64xf32, #tpu.memory_space<vmem>>, vector<16x64xf32>
    tpu.vector_store %arg6[%c0_10, %c0_11], %12 {strides = array<i32>} : memref<16x64xf32, #tpu.memory_space<vmem>>, vector<16x64xf32>,
    return
  }
  func.func @transform_0(%arg0: i32) -> (i32, i32) {
    %c0_i32 = arith.constant 0 : i32
    %c0_i32_0 = arith.constant 0 : i32
    return %arg0, %c0_i32 : i32, i32
  }
  func.func @transform_1(%arg0: i32) -> (i32, i32) {
    %c0_i32 = arith.constant 0 : i32
    %c0_i32_0 = arith.constant 0 : i32
    %c0_i32_1 = arith.constant 0 : i32
    return %c0_i32, %c0_i32_0 : i32, i32
  }
  func.func @transform_2(%arg0: i32) -> (i32, i32) {
    %c0_i32 = arith.constant 0 : i32
    %c0_i32_0 = arith.constant 0 : i32
    %c0_i32_1 = arith.constant 0 : i32
    return %c0_i32, %c0_i32_0 : i32, i32
  }
  func.func @transform_3(%arg0: i32) -> (i32, i32) {
    %c0_i32 = arith.constant 0 : i32
    %c0_i32_0 = arith.constant 0 : i32
    %c0_i32_1 = arith.constant 0 : i32
    return %c0_i32, %c0_i32_0 : i32, i32
  }
  func.func @transform_4(%arg0: i32) -> (i32, i32) {
    %c0_i32 = arith.constant 0 : i32
    %c0_i32_0 = arith.constant 0 : i32
    %c0_i32_1 = arith.constant 0 : i32
    return %c0_i32, %c0_i32_0 : i32, i32
  }
  func.func @transform_5(%arg0: i32) -> (i32, i32) {
    %c0_i32 = arith.constant 0 : i32
    %c0_i32_0 = arith.constant 0 : i32
    return %arg0, %c0_i32 : i32, i32
  }
}

</mosaic_0001>

<llo_original>
// kernel: _netg_forward.1
$region0: #{_netg_forward.1}
  #allocation0 [shape = 'u32[]', space=smem, size = 0x4, offset = 0x4, fixed_abs, tag = 'smem constant byte address 0x4 - core index']
  #allocation1 [shape = 'u32[72,128]{1,0:T(1,128)}', space=vmem, size = 0x9000, scoped, tag = 'internal scratch']
  %s0 = inlined_call_operand.vmem [shape: bf16[16,64], index: 0, kind: input, shape index: {}]
  %s1 = inlined_call_operand.vmem [shape: bf16[64,32], index: 1, kind: input, shape index: {}]
  %s2 = inlined_call_operand.vmem [shape: f32[1,32], index: 2, kind: input, shape index: {}]
  %s3 = inlined_call_operand.vmem [shape: bf16[32,64], index: 3, kind: input, shape index: {}]
  %s4 = inlined_call_operand.vmem [shape: f32[1,64], index: 4, kind: input, shape index: {}]
  %s5 = inlined_call_operand.hbm [shape: f32[16,64], index: 5, kind: output, shape index: {}]
  %s6 = sld [smem:[#allocation0]]
  $region30: #{_netg_forward.1} parent=0
    _
  %s8 = ssub.s32 1, %s6
  %s9 = scalar_select 0, %s8, %s6
  $region1: #{_netg_forward.1} parent=0
    #allocation2 [shape = 'u8[8192]{0}', space=vmem, size = 0x2000, scoped, tag = 'output window, operand 0, single buffered']
    #allocation3 [shape = 's32[1]{0}', space=sflag, size = 0x4, scoped, tag = 'scoped memory for _netg_forward.1']
    %10 = vsyncpa [#allocation3], 0
    // Predicated region
    $region2: #{_netg_forward.1} parent=1 // pred_check
      _
    $region3: #{_netg_forward.1} parent=1 // pred_check_branch
      %12 = sbr.rel (0) target = $region5
    $region4: #{_netg_forward.1} parent=1 // pred_region
      _
    $region5: #{_netg_forward.1} parent=1 // pred_fallthru
      _
    // Predicated region
    $region6: #{_netg_forward.1} parent=1 // pred_check
      _
    $region7: #{_netg_forward.1} parent=1 // pred_check_branch
      %14 = sbr.rel (0) target = $region9
    $region8: #{_netg_forward.1} parent=1 // pred_region
      _
    $region9: #{_netg_forward.1} parent=1 // pred_fallthru
      _
    // Predicated region
    $region10: #{_netg_forward.1} parent=1 // pred_check
      _
    $region11: #{_netg_forward.1} parent=1 // pred_check_branch
      %16 = sbr.rel (0) target = $region13
    $region12: #{_netg_forward.1} parent=1 // pred_region
      _
    $region13: #{_netg_forward.1} parent=1 // pred_fallthru
      _
    // Predicated region
    $region14: #{_netg_forward.1} parent=1 // pred_check
      _
    $region15: #{_netg_forward.1} parent=1 // pred_check_branch
      %18 = sbr.rel (0) target = $region17
    $region16: #{_netg_forward.1} parent=1 // pred_region
      _
    $region17: #{_netg_forward.1} parent=1 // pred_fallthru
      _
    // Predicated region
    $region18: #{_netg_forward.1} parent=1 // pred_check
      _
    $region19: #{_netg_forward.1} parent=1 // pred_check_branch
      %20 = sbr.rel (0) target = $region21
    $region20: #{_netg_forward.1} parent=1 // pred_region
      _
    $region21: #{_netg_forward.1} parent=1 // pred_fallthru
      _
    %v22 = vld [vmem:[%s0] sm:$0xf]
    %v23 = vld [vmem:[%s0 + $0x4] sm:$0xf]
    %v24 = vld [vmem:[%s1] sm:$0xf]
    %v25 = vld [vmem:[%s1 + $0x4] sm:$0xf]
    %v26 = vld [vmem:[%s1 + $0x8] sm:$0xf]
    %v27 = vld [vmem:[%s1 + $0xc] sm:$0xf]
    %v28 = vld [vmem:[%s1 + $0x10] sm:$0xf]
    %v29 = vld [vmem:[%s1 + $0x14] sm:$0xf]
    %v30 = vld [vmem:[%s1 + $0x18] sm:$0xf]
    %v31 = vld [vmem:[%s1 + $0x1c] sm:$0xf]
    %v32 = vld [vmem:[%s2] sm:$0x1]
    %v34 = vperm.slane %v32, 0
    %v38 = vunpack.c.l.b16 %v22
    %v39 = vunpack.c.l.b16 %v23
    %v40 = vpack.c.b16 %v39, %v38
    %v49 = vunpack.c.l.b16 %v24
    %v50 = vunpack.c.l.b16 %v25
    %v51 = vunpack.c.l.b16 %v26
    %v52 = vunpack.c.l.b16 %v27
    %v53 = vunpack.c.l.b16 %v28
    %v54 = vunpack.c.l.b16 %v29
    %v55 = vunpack.c.l.b16 %v30
    %v56 = vunpack.c.l.b16 %v31
    %v57 = vpack.c.b16 %v50, %v49
    %v58 = vpack.c.b16 %v52, %v51
    %v59 = vpack.c.b16 %v54, %v53
    %v60 = vpack.c.b16 %v56, %v55
    %vm65 = vcmask 523264
    %v67 = vsel %vm65, %v40, 0
    %69 = vmatpush.bf16.msra.mxu0 0
    %70 = vmatpush.bf16.msra.mxu0 0
    %71 = vmatpush.bf16.msra.mxu0 0
    %72 = vmatpush.bf16.msra.mxu0 0
    %73 = vmatpush.bf16.msra.mxu0 %v60
    %74 = vmatpush.bf16.msra.mxu0 %v59
    %75 = vmatpush.bf16.msra.mxu0 %v58
    %76 = vmatpush.bf16.msra.mxu0 %v57
    %77 = vmatmul.bf16.gmra.mxu0 %v67
    %v78 = vpop.f32.mrf.mxu0
    %v79 = vadd.f32 %v34, %v78
    %v80 = vpop.f32.mrf.mxu0
    %v81 = vadd.f32 %v34, %v80
    %82 = vdwg.mxu0
    %v83 = vtanh.pop %v79
    %v84 = vtanh.pop %v81
    %v85 = vpack.c.bf16 %v84, %v83
    %v86 = vld [vmem:[%s3] sm:$0xf]
    %v87 = vld [vmem:[%s3 + $0x4] sm:$0xf]
    %v88 = vld [vmem:[%s3 + $0x8] sm:$0xf]
    %v89 = vld [vmem:[%s3 + $0xc] sm:$0xf]
    %v90 = vld [vmem:[%s4] sm:$0x1]
    %v92 = vperm.slane %v90, 0
    %v98 = vunpack.c.l.b16 %v86
    %v99 = vunpack.c.l.b16 %v87
    %v100 = vunpack.c.l.b16 %v88
    %v101 = vunpack.c.l.b16 %v89
    %v102 = vpack.c.b16 %v99, %v98
    %v103 = vpack.c.b16 %v101, %v100
    %vm106 = vcmask 261120
    %v108 = vsel %vm106, %v85, 0
    %110 = vmatpush.bf16.msra.mxu0 0
    %111 = vmatpush.bf16.msra.mxu0 0
    %112 = vmatpush.bf16.msra.mxu0 0
    %113 = vmatpush.bf16.msra.mxu0 0
    %114 = vmatpush.bf16.msra.mxu0 0
    %115 = vmatpush.bf16.msra.mxu0 0
    %116 = vmatpush.bf16.msra.mxu0 %v103
    %117 = vmatpush.bf16.msra.mxu0 %v102
    %118 = vmatmul.bf16.gmra.mxu0 %v108
    %v119 = vpop.f32.mrf.mxu0
    %v120 = vadd.f32 %v92, %v119
    %v121 = vpop.f32.mrf.mxu0
    %v122 = vadd.f32 %v92, %v121
    %123 = vdwg.mxu0
    %124 = vst.msk [vmem:[#allocation2] sm:$0xff] %vm65, %v120
    %125 = vst.msk [vmem:[#allocation2 + $0x8] sm:$0xff] %vm65, %v122
    // Predicated region
    $region22: #{_netg_forward.1} parent=1 // pred_check
      _
    $region23: #{_netg_forward.1} parent=1 // pred_check_branch
      %127 = sbr.rel (0) target = $region25
    $region24: #{_netg_forward.1} parent=1 // pred_region
      %129 = vsyncadd [#allocation3], 0
      %s130 = sshll.u32 [#allocation2], 4
      %s131 = int_to_ptr.vmem [resolvable:$true] %s130
      %s132 = sshll.u32 %s5, 4
      %s133 = int_to_ptr.hbm [resolvable:$true] %s132
      %138 = dma.vmem_to_hbm [thread:$0]  %s131, 256, %s133, [#allocation3], 128, 128, 8
    $region25: #{_netg_forward.1} parent=1 // pred_fallthru
      _
    // Predicated region
    $region26: #{_netg_forward.1} parent=1 // pred_check
      _
    $region27: #{_netg_forward.1} parent=1 // pred_check_branch
      %140 = sbr.rel (0) target = $region29
    $region28: #{_netg_forward.1} parent=1 // pred_region
      %142 = dma.done [#allocation3], 256
    $region29: #{_netg_forward.1} parent=1 // pred_fallthru
      _
    %143 = vsyncpa [#allocation3], 1

</llo_original>
